<compile_context>
chip_gen: v7x
topology: tpu7x:2x2x1
jax: 0.10.0
libtpu: 0.0.40
codegen_flags: <defaults>
</compile_context>

<pallas_src>
import functools

import jax
import jax.numpy as jnp
import numpy as np
from jax import lax
from jax.experimental import pallas as pl
from jax.experimental.pallas import tpu as pltpu

_SIGN_FIX = np.int32(0x7FFFFFFF)
# order-preserving int32 keys of -inf / +inf (bounds of the non-NaN key range)
_KEY_POS_INF = int(np.array(np.inf, np.float32).view(np.int32))                 # 0x7F800000
_KEY_NEG_INF = int(np.array(-np.inf, np.float32).view(np.int32) ^ _SIGN_FIX)    # 0x807FFFFF


def _moments_kernel(x_ref, low_ref, high_ref,
                    low_out_ref, high_out_ref, inv_out_ref,
                    *, decay, max_,
                    k0_lo, k1_lo, frac_lo, k0_hi, k1_hi, frac_hi,
                    chunk_rows):
    R, L = x_ref.shape                       # (R, 128) f32, lane-dense
    nfull = R // chunk_rows
    rem = R - nfull * chunk_rows

    # ones matrices for the MXU count contraction (hoisted out of all loops)
    ones_full = jnp.ones((8, chunk_rows), jnp.bfloat16)
    ones_rem = jnp.ones((8, rem), jnp.bfloat16) if rem > 0 else None

    def traverse(init, chunk_fn):
        """carry = chunk_fn(x_chunk_values, ones_for_chunk, carry) over row-chunks."""
        carry = init
        if nfull == 1:
            carry = chunk_fn(x_ref[pl.ds(0, chunk_rows), :], ones_full, carry)
        elif nfull > 1:
            def body(i, c):
                start = pl.multiple_of(i * chunk_rows, chunk_rows)
                return chunk_fn(x_ref[pl.ds(start, chunk_rows), :], ones_full, c)
            carry = lax.fori_loop(0, nfull, body, carry)
        if rem > 0:
            carry = chunk_fn(x_ref[pl.ds(nfull * chunk_rows, rem), :], ones_rem, carry)
        return carry

    # ---- order-preserving key <-> f32 on (1,1) arrays ----------------------
    def key_to_f32(k):
        b = jnp.where(k >= 0, k, k ^ _SIGN_FIX)
        return pltpu.bitcast(b, jnp.float32)

    def lane_count(acc_f32_8x128):
        # per-lane counts are exact integers < 2^24 in f32; finish in int32.
        return jnp.sum(acc_f32_8x128[0:1, :].astype(jnp.int32), axis=1,
                       keepdims=True)                                  # (1,1) i32

    # ---- fused dual-rank count: (#x<=thr_a, #x<=thr_b) in ONE traversal -----
    def count_le_pair(thr_a, thr_b):
        z = jnp.zeros((8, L), jnp.float32)

        def chunk_fn(xc, ones_c, carry):
            acc_a, acc_b = carry
            m_a = (xc <= thr_a).astype(jnp.bfloat16)     # 0/1 mask, VPU
            m_b = (xc <= thr_b).astype(jnp.bfloat16)
            # column sums on the MXU (exact f32 accumulation of 0/1 values)
            acc_a = acc_a + jnp.dot(ones_c, m_a, preferred_element_type=jnp.float32)
            acc_b = acc_b + jnp.dot(ones_c, m_b, preferred_element_type=jnp.float32)
            return acc_a, acc_b

        acc_a, acc_b = traverse((z, z), chunk_fn)
        return lane_count(acc_a), lane_count(acc_b)

    # ---- 32-step bit-space binary search, both ranks fused ------------------
    lo_init = jnp.full((1, 1), _KEY_NEG_INF, jnp.int32)
    hi_init = jnp.full((1, 1), _KEY_POS_INF, jnp.int32)

    def search_body(_, carry):
        lo_a, hi_a, lo_b, hi_b = carry
        # overflow-safe floor((lo+hi)/2)
        mid_a = (lo_a >> 1) + (hi_a >> 1) + (lo_a & hi_a & 1)
        mid_b = (lo_b >> 1) + (hi_b >> 1) + (lo_b & hi_b & 1)
        cnt_a, cnt_b = count_le_pair(key_to_f32(mid_a), key_to_f32(mid_b))
        ge_a = cnt_a >= (k0_lo + 1)
        ge_b = cnt_b >= (k0_hi + 1)
        return (jnp.where(ge_a, lo_a, mid_a + 1), jnp.where(ge_a, mid_a, hi_a),
                jnp.where(ge_b, lo_b, mid_b + 1), jnp.where(ge_b, mid_b, hi_b))

    lo_a, _, lo_b, _ = lax.fori_loop(
        0, 32, search_body, (lo_init, hi_init, lo_init, hi_init))

    v0_lo = key_to_f32(lo_a)     # exact k0_lo-th smallest value, (1,1) f32
    v0_hi = key_to_f32(lo_b)     # exact k0_hi-th smallest value

    # ---- linear-interpolation epilogue (both quantiles, single traversal) ---
    need_lo = (k1_lo != k0_lo) and (frac_lo != 0.0)
    need_hi = (k1_hi != k0_hi) and (frac_hi != 0.0)

    q_low, q_high = v0_lo, v0_hi
    if need_lo or need_hi:
        z = jnp.zeros((8, L), jnp.float32)
        inf_row = jnp.full((1, L), jnp.inf, jnp.float32)

        def epi_chunk(xc, ones_c, carry):
            ca, cb, na, nb = carry
            m_a = (xc <= v0_lo).astype(jnp.bfloat16)
            m_b = (xc <= v0_hi).astype(jnp.bfloat16)
            ca = ca + jnp.dot(ones_c, m_a, preferred_element_type=jnp.float32)
            cb = cb + jnp.dot(ones_c, m_b, preferred_element_type=jnp.float32)
            na = jnp.minimum(na, jnp.min(jnp.where(xc > v0_lo, xc, jnp.inf),
                                         axis=0, keepdims=True))
            nb = jnp.minimum(nb, jnp.min(jnp.where(xc > v0_hi, xc, jnp.inf),
                                         axis=0, keepdims=True))
            return ca, cb, na, nb

        ca, cb, na, nb = traverse((z, z, inf_row, inf_row), epi_chunk)
        cnt_a = lane_count(ca)
        cnt_b = lane_count(cb)
        nxt_a = jnp.min(na, axis=1, keepdims=True)       # smallest value > v0_lo
        nxt_b = jnp.min(nb, axis=1, keepdims=True)       # smallest value > v0_hi
        if need_lo:
            v1_lo = jnp.where(cnt_a >= (k1_lo + 1), v0_lo, nxt_a)
            q_low = v0_lo + (v1_lo - v0_lo) * jnp.float32(frac_lo)
        if need_hi:
            v1_hi = jnp.where(cnt_b >= (k1_hi + 1), v0_hi, nxt_b)
            q_high = v0_hi + (v1_hi - v0_hi) * jnp.float32(frac_hi)

    # ---- EMA buffers + invscale ---------------------------------------------
    low_new = jnp.float32(decay) * low_ref[...] + jnp.float32(1.0 - decay) * q_low
    high_new = jnp.float32(decay) * high_ref[...] + jnp.float32(1.0 - decay) * q_high
    inv = jnp.maximum(jnp.float32(1.0 / max_), high_new - low_new)

    low_out_ref[...] = low_new
    high_out_ref[...] = high_new
    inv_out_ref[...] = inv


def moments_forward(x, low, high, *, decay=0.99, max_=1.0,
                    percentile_low=0.05, percentile_high=0.95):
    """Functional equivalent of Moments.forward.

    Returns ((low, invscale), (new_low_buffer, new_high_buffer))."""
    x = jnp.asarray(x, jnp.float32)
    n = int(x.size)

    lanes = 128
    flat = x.reshape(-1)
    npad = ((n + lanes - 1) // lanes) * lanes
    if npad != n:
        # TODO(synk): avoid this HBM copy for large ragged inputs by DMA'ing the
        # exact n elements into a VMEM scratch and +inf-filling the tail in-kernel.
        flat = jnp.concatenate(
            [flat, jnp.full((npad - n,), jnp.inf, dtype=jnp.float32)])
    R = npad // lanes
    xd = flat.reshape(R, lanes)

    low2 = jnp.asarray(low, jnp.float32).reshape(1, 1)
    high2 = jnp.asarray(high, jnp.float32).reshape(1, 1)

    # static ranks / interpolation fractions (torch.quantile 'linear')
    def rk(q):
        pos = q * (n - 1)
        k0 = int(np.floor(pos))
        k1 = min(k0 + 1, n - 1)
        return k0, k1, float(pos - k0)

    k0l, k1l, fl = rk(float(percentile_low))
    k0h, k1h, fh = rk(float(percentile_high))

    chunk_rows = min(R, 256)      # 256 rows -> 128 KiB/chunk, bounded vreg pressure

    kernel = functools.partial(
        _moments_kernel, decay=float(decay), max_=float(max_),
        k0_lo=k0l, k1_lo=k1l, frac_lo=fl,
        k0_hi=k0h, k1_hi=k1h, frac_hi=fh,
        chunk_rows=chunk_rows)

    # generation-aware VMEM limit: only the f32 data is resident (no key copy).
    data_bytes = int(xd.size) * 4
    try:
        vmem_cap = int(pltpu.get_tpu_info().vmem_capacity_bytes)
    except Exception:
        vmem_cap = 64 * 2 ** 20
    vmem_limit = int(min(int(0.8 * vmem_cap),
                         max(32 * 2 ** 20, data_bytes + 8 * 2 ** 20)))

    vmem = pltpu.MemorySpace.VMEM
    low_new, high_new, inv = pl.pallas_call(
        kernel,
        out_shape=(jax.ShapeDtypeStruct((1, 1), jnp.float32),
                   jax.ShapeDtypeStruct((1, 1), jnp.float32),
                   jax.ShapeDtypeStruct((1, 1), jnp.float32)),
        in_specs=[pl.BlockSpec(memory_space=vmem)] * 3,
        out_specs=(pl.BlockSpec(memory_space=vmem),) * 3,
        compiler_params=pltpu.CompilerParams(vmem_limit_bytes=vmem_limit),
    )(xd, low2, high2)

    low_s = low_new.reshape(())
    high_s = high_new.reshape(())
    inv_s = inv.reshape(())
    return (low_s, inv_s), (low_s, high_s)


def _reference(x, low, high, *, decay=0.99, max_=1.0, p_low=0.05, p_high=0.95):
    flat = np.asarray(x, np.float32).reshape(-1)
    n = flat.size
    srt = np.sort(flat)

    def q(qv):
        pos = qv * (n - 1)
        k0 = int(np.floor(pos))
        k1 = min(k0 + 1, n - 1)
        frac = pos - k0
        return srt[k0] + (srt[k1] - srt[k0]) * frac

    new_low = decay * low + (1.0 - decay) * q(p_low)
    new_high = decay * high + (1.0 - decay) * q(p_high)
    inv = max(1.0 / max_, new_high - new_low)
    return new_low, new_high, inv


if __name__ == "__main__":
    key = jax.random.PRNGKey(0)
    x = jax.random.normal(key, (2, 4, 16, 16), dtype=jnp.float32)  # NCHW

    # buffers (deterministic init, as in Moments.__init__)
    low_buf = jnp.zeros((), jnp.float32)
    high_buf = jnp.zeros((), jnp.float32)

    (low, invscale), (new_low, new_high) = moments_forward(
        x, low_buf, high_buf, decay=0.99, max_=1.0,
        percentile_low=0.05, percentile_high=0.95)
    jax.block_until_ready((low, invscale, new_low, new_high))

    ref_low, ref_high, ref_inv = _reference(np.asarray(x), 0.0, 0.0)
    np.testing.assert_allclose(np.asarray(low), ref_low, atol=1e-5, rtol=1e-5)
    np.testing.assert_allclose(np.asarray(new_high), ref_high, atol=1e-5, rtol=1e-5)
    np.testing.assert_allclose(np.asarray(invscale), ref_inv, atol=1e-5, rtol=1e-5)

    print("KERNEL_OK")
</pallas_src>

<mosaic_0001>
module attributes {stable_mosaic.version = 11 : i64} {
  func.func @_moments_kernel(%arg0: memref<16x128xf32, #tpu.memory_space<vmem>>, %arg1: memref<1x1xf32, #tpu.memory_space<vmem>>, %arg2: memref<1x1xf32, #tpu.memory_space<vmem>>, %arg3: memref<1x1xf32, #tpu.memory_space<vmem>>, %arg4: memref<1x1xf32, #tpu.memory_space<vmem>>, %arg5: memref<1x1xf32, #tpu.memory_space<vmem>>) attributes {dimension_semantics = [], scalar_prefetch = 0 : i64, scratch_operands = 0 : i64, tpu.core_type = #tpu.core_type<tc>} {
    %cst = arith.constant 1.000000e+00 : bf16
    %0 = vector.broadcast %cst : bf16 to vector<8x16xbf16>
    %c-2139095041_i32 = arith.constant -2139095041 : i32
    %1 = vector.broadcast %c-2139095041_i32 : i32 to vector<1x1xi32>
    %c2139095040_i32 = arith.constant 2139095040 : i32
    %2 = vector.broadcast %c2139095040_i32 : i32 to vector<1x1xi32>
    %c0_i32 = arith.constant 0 : i32
    %c32_i32 = arith.constant 32 : i32
    %3 = arith.addi %c0_i32, %c32_i32 : i32
    %c1_i32 = arith.constant 1 : i32
    %4:4 = scf.for %arg6 = %c0_i32 to %3 step %c1_i32 iter_args(%arg7 = %1, %arg8 = %2, %arg9 = %1, %arg10 = %2) -> (vector<1x1xi32>, vector<1x1xi32>, vector<1x1xi32>, vector<1x1xi32>)  : i32 {
      %c1_i32_33 = arith.constant 1 : i32
      %92 = vector.broadcast %c1_i32_33 : i32 to vector<1x1xi32>
      %93 = arith.shrsi %arg7, %92 : vector<1x1xi32>
      %c1_i32_34 = arith.constant 1 : i32
      %94 = vector.broadcast %c1_i32_34 : i32 to vector<1x1xi32>
      %95 = arith.shrsi %arg8, %94 : vector<1x1xi32>
      %96 = arith.addi %93, %95 : vector<1x1xi32>
      %97 = arith.andi %arg7, %arg8 : vector<1x1xi32>
      %c1_i32_35 = arith.constant 1 : i32
      %98 = vector.broadcast %c1_i32_35 : i32 to vector<1x1xi32>
      %99 = arith.andi %97, %98 : vector<1x1xi32>
      %100 = arith.addi %96, %99 : vector<1x1xi32>
      %c1_i32_36 = arith.constant 1 : i32
      %101 = vector.broadcast %c1_i32_36 : i32 to vector<1x1xi32>
      %102 = arith.shrsi %arg9, %101 : vector<1x1xi32>
      %c1_i32_37 = arith.constant 1 : i32
      %103 = vector.broadcast %c1_i32_37 : i32 to vector<1x1xi32>
      %104 = arith.shrsi %arg10, %103 : vector<1x1xi32>
      %105 = arith.addi %102, %104 : vector<1x1xi32>
      %106 = arith.andi %arg9, %arg10 : vector<1x1xi32>
      %c1_i32_38 = arith.constant 1 : i32
      %107 = vector.broadcast %c1_i32_38 : i32 to vector<1x1xi32>
      %108 = arith.andi %106, %107 : vector<1x1xi32>
      %109 = arith.addi %105, %108 : vector<1x1xi32>
      %c0_i32_39 = arith.constant 0 : i32
      %110 = vector.broadcast %c0_i32_39 : i32 to vector<1x1xi32>
      %111 = arith.cmpi sge, %100, %110 : vector<1x1xi32>
      %c2147483647_i32_40 = arith.constant 2147483647 : i32
      %112 = vector.broadcast %c2147483647_i32_40 : i32 to vector<1x1xi32>
      %113 = arith.xori %100, %112 : vector<1x1xi32>
      %114 = arith.select %111, %100, %113 : vector<1x1xi1>, vector<1x1xi32>
      %115 = tpu.bitcast %114 : vector<1x1xi32> -> vector<1x1xf32>
      %c0_i32_41 = arith.constant 0 : i32
      %116 = vector.broadcast %c0_i32_41 : i32 to vector<1x1xi32>
      %117 = arith.cmpi sge, %109, %116 : vector<1x1xi32>
      %c2147483647_i32_42 = arith.constant 2147483647 : i32
      %118 = vector.broadcast %c2147483647_i32_42 : i32 to vector<1x1xi32>
      %119 = arith.xori %109, %118 : vector<1x1xi32>
      %120 = arith.select %117, %109, %119 : vector<1x1xi1>, vector<1x1xi32>
      %121 = tpu.bitcast %120 : vector<1x1xi32> -> vector<1x1xf32>
      %cst_43 = arith.constant 0.000000e+00 : f32
      %122 = vector.broadcast %cst_43 : f32 to vector<8x128xf32>
      %c0_44 = arith.constant 0 : index
      %c0_45 = arith.constant 0 : index
      %123 = vector.load %arg0[%c0_44, %c0_45] : memref<16x128xf32, #tpu.memory_space<vmem>>, vector<16x128xf32>
      %124 = vector.broadcast %115 : vector<1x1xf32> to vector<16x128xf32>
      %125 = arith.cmpf ole, %123, %124 : vector<16x128xf32>
      %126 = arith.extui %125 : vector<16x128xi1> to vector<16x128xi32>
      %127 = arith.sitofp %126 : vector<16x128xi32> to vector<16x128xf32>
      %128 = arith.truncf %127 : vector<16x128xf32> to vector<16x128xbf16>
      %129 = vector.broadcast %121 : vector<1x1xf32> to vector<16x128xf32>
      %130 = arith.cmpf ole, %123, %129 : vector<16x128xf32>
      %131 = arith.extui %130 : vector<16x128xi1> to vector<16x128xi32>
      %132 = arith.sitofp %131 : vector<16x128xi32> to vector<16x128xf32>
      %133 = arith.truncf %132 : vector<16x128xf32> to vector<16x128xbf16>
      %cst_46 = arith.constant dense<0.000000e+00> : vector<8x128xf32>
      %134 = tpu.matmul %0, %128, %cst_46 {dimension_numbers = #tpu.dot_dimension_numbers<[1], [0], [0], [1], [0, 0, 1, 1], [], []>} : vector<8x16xbf16>, vector<16x128xbf16>, vector<8x128xf32> -> vector<8x128xf32>
      %135 = arith.addf %122, %134 : vector<8x128xf32>
      %cst_47 = arith.constant dense<0.000000e+00> : vector<8x128xf32>
      %136 = tpu.matmul %0, %133, %cst_47 {dimension_numbers = #tpu.dot_dimension_numbers<[1], [0], [0], [1], [0, 0, 1, 1], [], []>} : vector<8x16xbf16>, vector<16x128xbf16>, vector<8x128xf32> -> vector<8x128xf32>
      %137 = arith.addf %122, %136 : vector<8x128xf32>
      %138 = vector.extract_strided_slice %135 {offsets = [0, 0], sizes = [1, 128], strides = [1, 1]} : vector<8x128xf32> to vector<1x128xf32>
      %139 = arith.fptosi %138 : vector<1x128xf32> to vector<1x128xi32>
      %cst_48 = arith.constant dense<0> : vector<1xi32>
      %140 = vector.multi_reduction <add>, %139, %cst_48 [1] : vector<1x128xi32> to vector<1xi32>
      %141 = vector.shape_cast %140 : vector<1xi32> to vector<1x1xi32>
      %142 = vector.extract_strided_slice %137 {offsets = [0, 0], sizes = [1, 128], strides = [1, 1]} : vector<8x128xf32> to vector<1x128xf32>
      %143 = arith.fptosi %142 : vector<1x128xf32> to vector<1x128xi32>
      %cst_49 = arith.constant dense<0> : vector<1xi32>
      %144 = vector.multi_reduction <add>, %143, %cst_49 [1] : vector<1x128xi32> to vector<1xi32>
      %145 = vector.shape_cast %144 : vector<1xi32> to vector<1x1xi32>
      %c103_i32 = arith.constant 103 : i32
      %146 = vector.broadcast %c103_i32 : i32 to vector<1x1xi32>
      %147 = arith.cmpi sge, %141, %146 : vector<1x1xi32>
      %c1945_i32 = arith.constant 1945 : i32
      %148 = vector.broadcast %c1945_i32 : i32 to vector<1x1xi32>
      %149 = arith.cmpi sge, %145, %148 : vector<1x1xi32>
      %c1_i32_50 = arith.constant 1 : i32
      %150 = vector.broadcast %c1_i32_50 : i32 to vector<1x1xi32>
      %151 = arith.addi %100, %150 : vector<1x1xi32>
      %152 = arith.select %147, %arg7, %151 : vector<1x1xi1>, vector<1x1xi32>
      %153 = arith.select %147, %100, %arg8 : vector<1x1xi1>, vector<1x1xi32>
      %c1_i32_51 = arith.constant 1 : i32
      %154 = vector.broadcast %c1_i32_51 : i32 to vector<1x1xi32>
      %155 = arith.addi %109, %154 : vector<1x1xi32>
      %156 = arith.select %149, %arg9, %155 : vector<1x1xi1>, vector<1x1xi32>
      %157 = arith.select %149, %109, %arg10 : vector<1x1xi1>, vector<1x1xi32>
      scf.yield %152, %153, %156, %157 : vector<1x1xi32>, vector<1x1xi32>, vector<1x1xi32>, vector<1x1xi32>
    }
    %c0_i32_0 = arith.constant 0 : i32
    %5 = vector.broadcast %c0_i32_0 : i32 to vector<1x1xi32>
    %6 = arith.cmpi sge, %4#0, %5 : vector<1x1xi32>
    %c2147483647_i32 = arith.constant 2147483647 : i32
    %7 = vector.broadcast %c2147483647_i32 : i32 to vector<1x1xi32>
    %8 = arith.xori %4#0, %7 : vector<1x1xi32>
    %9 = arith.select %6, %4#0, %8 : vector<1x1xi1>, vector<1x1xi32>
    %10 = tpu.bitcast %9 : vector<1x1xi32> -> vector<1x1xf32>
    %c0_i32_1 = arith.constant 0 : i32
    %11 = vector.broadcast %c0_i32_1 : i32 to vector<1x1xi32>
    %12 = arith.cmpi sge, %4#2, %11 : vector<1x1xi32>
    %c2147483647_i32_2 = arith.constant 2147483647 : i32
    %13 = vector.broadcast %c2147483647_i32_2 : i32 to vector<1x1xi32>
    %14 = arith.xori %4#2, %13 : vector<1x1xi32>
    %15 = arith.select %12, %4#2, %14 : vector<1x1xi1>, vector<1x1xi32>
    %16 = tpu.bitcast %15 : vector<1x1xi32> -> vector<1x1xf32>
    %cst_3 = arith.constant 0.000000e+00 : f32
    %17 = vector.broadcast %cst_3 : f32 to vector<8x128xf32>
    %cst_4 = arith.constant 0x7F800000 : f32
    %18 = vector.broadcast %cst_4 : f32 to vector<1x128xf32>
    %c0 = arith.constant 0 : index
    %c0_5 = arith.constant 0 : index
    %19 = vector.load %arg0[%c0, %c0_5] : memref<16x128xf32, #tpu.memory_space<vmem>>, vector<16x128xf32>
    %20 = vector.broadcast %10 : vector<1x1xf32> to vector<16x128xf32>
    %21 = arith.cmpf ole, %19, %20 : vector<16x128xf32>
    %22 = arith.extui %21 : vector<16x128xi1> to vector<16x128xi32>
    %23 = arith.sitofp %22 : vector<16x128xi32> to vector<16x128xf32>
    %24 = arith.truncf %23 : vector<16x128xf32> to vector<16x128xbf16>
    %25 = vector.broadcast %16 : vector<1x1xf32> to vector<16x128xf32>
    %26 = arith.cmpf ole, %19, %25 : vector<16x128xf32>
    %27 = arith.extui %26 : vector<16x128xi1> to vector<16x128xi32>
    %28 = arith.sitofp %27 : vector<16x128xi32> to vector<16x128xf32>
    %29 = arith.truncf %28 : vector<16x128xf32> to vector<16x128xbf16>
    %cst_6 = arith.constant dense<0.000000e+00> : vector<8x128xf32>
    %30 = tpu.matmul %0, %24, %cst_6 {dimension_numbers = #tpu.dot_dimension_numbers<[1], [0], [0], [1], [0, 0, 1, 1], [], []>} : vector<8x16xbf16>, vector<16x128xbf16>, vector<8x128xf32> -> vector<8x128xf32>
    %31 = arith.addf %17, %30 : vector<8x128xf32>
    %cst_7 = arith.constant dense<0.000000e+00> : vector<8x128xf32>
    %32 = tpu.matmul %0, %29, %cst_7 {dimension_numbers = #tpu.dot_dimension_numbers<[1], [0], [0], [1], [0, 0, 1, 1], [], []>} : vector<8x16xbf16>, vector<16x128xbf16>, vector<8x128xf32> -> vector<8x128xf32>
    %33 = arith.addf %17, %32 : vector<8x128xf32>
    %34 = vector.broadcast %10 : vector<1x1xf32> to vector<16x128xf32>
    %35 = arith.cmpf ogt, %19, %34 : vector<16x128xf32>
    %cst_8 = arith.constant 0x7F800000 : f32
    %36 = vector.broadcast %cst_8 : f32 to vector<16x128xf32>
    %37 = arith.select %35, %19, %36 : vector<16x128xi1>, vector<16x128xf32>
    %cst_9 = arith.constant dense<0x7F800000> : vector<128xf32>
    %38 = vector.multi_reduction <minimumf>, %37, %cst_9 [0] : vector<16x128xf32> to vector<128xf32>
    %39 = vector.shape_cast %38 : vector<128xf32> to vector<1x128xf32>
    %40 = arith.minimumf %18, %39 : vector<1x128xf32>
    %41 = vector.broadcast %16 : vector<1x1xf32> to vector<16x128xf32>
    %42 = arith.cmpf ogt, %19, %41 : vector<16x128xf32>
    %cst_10 = arith.constant 0x7F800000 : f32
    %43 = vector.broadcast %cst_10 : f32 to vector<16x128xf32>
    %44 = arith.select %42, %19, %43 : vector<16x128xi1>, vector<16x128xf32>
    %cst_11 = arith.constant dense<0x7F800000> : vector<128xf32>
    %45 = vector.multi_reduction <minimumf>, %44, %cst_11 [0] : vector<16x128xf32> to vector<128xf32>
    %46 = vector.shape_cast %45 : vector<128xf32> to vector<1x128xf32>
    %47 = arith.minimumf %18, %46 : vector<1x128xf32>
    %48 = vector.extract_strided_slice %31 {offsets = [0, 0], sizes = [1, 128], strides = [1, 1]} : vector<8x128xf32> to vector<1x128xf32>
    %49 = arith.fptosi %48 : vector<1x128xf32> to vector<1x128xi32>
    %cst_12 = arith.constant dense<0> : vector<1xi32>
    %50 = vector.multi_reduction <add>, %49, %cst_12 [1] : vector<1x128xi32> to vector<1xi32>
    %51 = vector.shape_cast %50 : vector<1xi32> to vector<1x1xi32>
    %52 = vector.extract_strided_slice %33 {offsets = [0, 0], sizes = [1, 128], strides = [1, 1]} : vector<8x128xf32> to vector<1x128xf32>
    %53 = arith.fptosi %52 : vector<1x128xf32> to vector<1x128xi32>
    %cst_13 = arith.constant dense<0> : vector<1xi32>
    %54 = vector.multi_reduction <add>, %53, %cst_13 [1] : vector<1x128xi32> to vector<1xi32>
    %55 = vector.shape_cast %54 : vector<1xi32> to vector<1x1xi32>
    %cst_14 = arith.constant dense<0x7F800000> : vector<1xf32>
    %56 = vector.multi_reduction <minimumf>, %40, %cst_14 [1] : vector<1x128xf32> to vector<1xf32>
    %57 = vector.shape_cast %56 : vector<1xf32> to vector<1x1xf32>
    %cst_15 = arith.constant dense<0x7F800000> : vector<1xf32>
    %58 = vector.multi_reduction <minimumf>, %47, %cst_15 [1] : vector<1x128xf32> to vector<1xf32>
    %59 = vector.shape_cast %58 : vector<1xf32> to vector<1x1xf32>
    %c104_i32 = arith.constant 104 : i32
    %60 = vector.broadcast %c104_i32 : i32 to vector<1x1xi32>
    %61 = arith.cmpi sge, %51, %60 : vector<1x1xi32>
    %62 = arith.select %61, %10, %57 : vector<1x1xi1>, vector<1x1xf32>
    %63 = arith.subf %62, %10 : vector<1x1xf32>
    %cst_16 = arith.constant 3.500000e-01 : f32
    %64 = vector.broadcast %cst_16 : f32 to vector<1x1xf32>
    %65 = arith.mulf %63, %64 : vector<1x1xf32>
    %66 = arith.addf %10, %65 : vector<1x1xf32>
    %c1946_i32 = arith.constant 1946 : i32
    %67 = vector.broadcast %c1946_i32 : i32 to vector<1x1xi32>
    %68 = arith.cmpi sge, %55, %67 : vector<1x1xi32>
    %69 = arith.select %68, %16, %59 : vector<1x1xi1>, vector<1x1xf32>
    %70 = arith.subf %69, %16 : vector<1x1xf32>
    %cst_17 = arith.constant 6.500000e-01 : f32
    %71 = vector.broadcast %cst_17 : f32 to vector<1x1xf32>
    %72 = arith.mulf %70, %71 : vector<1x1xf32>
    %73 = arith.addf %16, %72 : vector<1x1xf32>
    %c0_18 = arith.constant 0 : index
    %c0_19 = arith.constant 0 : index
    %74 = vector.load %arg1[%c0_18, %c0_19] : memref<1x1xf32, #tpu.memory_space<vmem>>, vector<1x1xf32>
    %cst_20 = arith.constant 9.900000e-01 : f32
    %75 = vector.broadcast %cst_20 : f32 to vector<1x1xf32>
    %76 = arith.mulf %75, %74 : vector<1x1xf32>
    %cst_21 = arith.constant 0.00999999977 : f32
    %77 = vector.broadcast %cst_21 : f32 to vector<1x1xf32>
    %78 = arith.mulf %77, %66 : vector<1x1xf32>
    %79 = arith.addf %76, %78 : vector<1x1xf32>
    %c0_22 = arith.constant 0 : index
    %c0_23 = arith.constant 0 : index
    %80 = vector.load %arg2[%c0_22, %c0_23] : memref<1x1xf32, #tpu.memory_space<vmem>>, vector<1x1xf32>
    %cst_24 = arith.constant 9.900000e-01 : f32
    %81 = vector.broadcast %cst_24 : f32 to vector<1x1xf32>
    %82 = arith.mulf %81, %80 : vector<1x1xf32>
    %cst_25 = arith.constant 0.00999999977 : f32
    %83 = vector.broadcast %cst_25 : f32 to vector<1x1xf32>
    %84 = arith.mulf %83, %73 : vector<1x1xf32>
    %85 = arith.addf %82, %84 : vector<1x1xf32>
    %86 = arith.subf %85, %79 : vector<1x1xf32>
    %cst_26 = arith.constant 1.000000e+00 : f32
    %87 = vector.broadcast %cst_26 : f32 to vector<1x1xf32>
    %88 = arith.maximumf %87, %86 : vector<1x1xf32>
    %c0_27 = arith.constant 0 : index
    %c0_28 = arith.constant 0 : index
    %89 = vector.load %arg3[%c0_27, %c0_28] : memref<1x1xf32, #tpu.memory_space<vmem>>, vector<1x1xf32>
    tpu.vector_store %arg3[%c0_27, %c0_28], %79 {strides = array<i32>} : memref<1x1xf32, #tpu.memory_space<vmem>>, vector<1x1xf32>,
    %c0_29 = arith.constant 0 : index
    %c0_30 = arith.constant 0 : index
    %90 = vector.load %arg4[%c0_29, %c0_30] : memref<1x1xf32, #tpu.memory_space<vmem>>, vector<1x1xf32>
    tpu.vector_store %arg4[%c0_29, %c0_30], %85 {strides = array<i32>} : memref<1x1xf32, #tpu.memory_space<vmem>>, vector<1x1xf32>,
    %c0_31 = arith.constant 0 : index
    %c0_32 = arith.constant 0 : index
    %91 = vector.load %arg5[%c0_31, %c0_32] : memref<1x1xf32, #tpu.memory_space<vmem>>, vector<1x1xf32>
    tpu.vector_store %arg5[%c0_31, %c0_32], %88 {strides = array<i32>} : memref<1x1xf32, #tpu.memory_space<vmem>>, vector<1x1xf32>,
    return
  }
}

</mosaic_0001>

<llo_original>
// kernel: tpu_custom_call.1
$region0: #{tpu_custom_call.1}
  #allocation0 [shape = 'u32[]', space=smem, size = 0x4, offset = 0x4, fixed_abs, tag = 'smem constant byte address 0x4 - core index']
  #allocation1 [shape = 'u32[144,128]{1,0:T(1,128)}', space=vmem, size = 0x12000, scoped, tag = 'internal scratch']
  #allocation2 [shape = 'f32[1,1]{1,0:T(1,128)S(1)}', space=vmem, size = 0x200, scoped, tag = 'scoped memory for tpu_custom_call.1']
  #allocation3 [shape = 'f32[1,1]{1,0:T(1,128)S(1)}', space=vmem, size = 0x200, scoped, tag = 'scoped memory for tpu_custom_call.1']
  %s0 = inlined_call_operand.hbm [shape: f32[16,128], index: 0, kind: input, shape index: {}]
  %s1 = inlined_call_operand.<no memory space> [shape: f32[1,1], index: 1, kind: input, shape index: {}]
  %s2 = inlined_call_operand.<no memory space> [shape: f32[1,1], index: 2, kind: input, shape index: {}]
  %s3 = inlined_call_operand.hbm [shape: f32[1,1], index: 3, kind: output, shape index: {0}]
  %s4 = inlined_call_operand.hbm [shape: f32[1,1], index: 4, kind: output, shape index: {1}]
  %s5 = inlined_call_operand.hbm [shape: f32[1,1], index: 5, kind: output, shape index: {2}]
  %6 = xla_tuple %s3, %s4, %s5
  %s7 = sld [smem:[#allocation0]]
  $region49: #{tpu_custom_call.1} parent=0
    _
  %s9 = ssub.s32 1, %s7
  %s10 = scalar_select 0, %s9, %s7
  %v11 = vstv %s1
  %12 = vst [vmem:[#allocation2] sm:$0x1] %v11
  %v13 = vstv %s2
  %14 = vst [vmem:[#allocation3] sm:$0x1] %v13
  $region1: #{tpu_custom_call.1} parent=0
    #allocation4 [shape = 'u8[8192]{0}', space=vmem, size = 0x2000, scoped, tag = 'input window, operand 0, single buffered']
    #allocation5 [shape = 's32[1]{0}', space=sflag, size = 0x4, scoped, tag = 'scoped memory for tpu_custom_call.1']
    #allocation6 [shape = 's32[1]{0}', space=sflag, size = 0x4, scoped, tag = 'scoped memory for tpu_custom_call.1']
    #allocation7 [shape = 'u8[512]{0}', space=vmem, size = 0x400, scoped, tag = 'output window, operand 0, single buffered']
    #allocation8 [shape = 'u8[512]{0}', space=vmem, size = 0x400, scoped, tag = 'output window, operand 1, single buffered']
    #allocation9 [shape = 's32[1]{0}', space=sflag, size = 0x4, scoped, tag = 'scoped memory for tpu_custom_call.1']
    #allocation10 [shape = 'u8[512]{0}', space=vmem, size = 0x400, scoped, tag = 'output window, operand 2, single buffered']
    %15 = vsyncpa [#allocation5], 0
    %16 = vsyncpa [#allocation6], 0
    %17 = vsyncpa [#allocation9], 0
    // Predicated region
    $region2: #{tpu_custom_call.1} parent=1 // pred_check
      _
    $region3: #{tpu_custom_call.1} parent=1 // pred_check_branch
      %19 = sbr.rel (0) target = $region5
    $region4: #{tpu_custom_call.1} parent=1 // pred_region
      %s21 = ssub.s32 256, 256
      %22 = vsyncadd [#allocation5], %s21
      %s23 = sshll.u32 [#allocation4], 4
      %s24 = int_to_ptr.vmem [resolvable:$true] %s23
      %29 = dma.hbm_to_vmem [thread:$0]  %s0, 256, %s24, [#allocation5], 128, 128, 8
    $region5: #{tpu_custom_call.1} parent=1 // pred_fallthru
      _
    // Predicated region
    $region6: #{tpu_custom_call.1} parent=1 // pred_check
      _
    $region7: #{tpu_custom_call.1} parent=1 // pred_check_branch
      %31 = sbr.rel (0) target = $region9
    $region8: #{tpu_custom_call.1} parent=1 // pred_region
      _
    $region9: #{tpu_custom_call.1} parent=1 // pred_fallthru
      _
    // Predicated region
    $region10: #{tpu_custom_call.1} parent=1 // pred_check
      _
    $region11: #{tpu_custom_call.1} parent=1 // pred_check_branch
      %33 = sbr.rel (0) target = $region13
    $region12: #{tpu_custom_call.1} parent=1 // pred_region
      _
    $region13: #{tpu_custom_call.1} parent=1 // pred_fallthru
      _
    // Predicated region
    $region14: #{tpu_custom_call.1} parent=1 // pred_check
      _
    $region15: #{tpu_custom_call.1} parent=1 // pred_check_branch
      %35 = sbr.rel (0) target = $region17
    $region16: #{tpu_custom_call.1} parent=1 // pred_region
      %36 = dma.done [#allocation5], 256
    $region17: #{tpu_custom_call.1} parent=1 // pred_fallthru
      _
    loop: start=0, step=1, limit=32
    $region18: #{tpu_custom_call.1} parent=1 // loop_pre_header
      _
    $region19: #{tpu_custom_call.1} parent=1 // loop_header
      %s40 = sphi 0, %s44
      %p41 = scmp.ge.s32.totalorder %s40, 32
      %v45 = vphi 2155872255, %v209
      %v46 = vphi 2139095040, %v210
      %v47 = vphi 2155872255, %v212
      %v48 = vphi 2139095040, %v213
    $region20: #{tpu_custom_call.1} parent=1 // loop_header_branch
      %43 = sbr.rel (%p41) target = $region24
    $region21: #{tpu_custom_call.1} parent=1 // loop_body
      %v49 = vshra.s32 %v45, 1
      %v50 = vshra.s32 %v46, 1
      %v51 = vadd.s32 %v49, %v50
      %v52 = vand.u32 %v45, %v46
      %v53 = vand.u32 %v52, 1
      %v54 = vadd.s32 %v51, %v53
      %v55 = vshra.s32 %v47, 1
      %v56 = vshra.s32 %v48, 1
      %v57 = vadd.s32 %v55, %v56
      %v58 = vand.u32 %v47, %v48
      %v59 = vand.u32 %v58, 1
      %v60 = vadd.s32 %v57, %v59
      %vm61 = vcmp.ge.s32.totalorder %v54, 0
      %v62 = vxor.u32 %v54, 2147483647
      %v63 = vsel %vm61, %v54, %v62
      %vm65 = vcmp.ge.s32.totalorder %v60, 0
      %v66 = vxor.u32 %v60, 2147483647
      %v67 = vsel %vm65, %v60, %v66
      %v69 = vld [vmem:[#allocation4] sm:$0xff]
      %v70 = vld [vmem:[#allocation4 + $0x8] sm:$0xff]
      %v71 = vlaneseq
      %v72 = vshrl.u32 %v71, 7
      %v73 = vsub.s32 0, %v72
      %v74 = vrot.slane %v63, %v73
      %vm75 = vcmp.le.f32.partialorder %v69, %v74
      %vm76 = vcmp.le.f32.partialorder %v70, %v74
      %v77 = vsel %vm75, 1, 0
      %v78 = vsel %vm76, 1, 0
      %v79 = vcvt.s32.f32 %v77
      %v80 = vcvt.s32.f32 %v78
      %v81 = vpack.c.bf16 %v80, %v79
      %v82 = vlaneseq
      %v83 = vshrl.u32 %v82, 7
      %v84 = vsub.s32 0, %v83
      %v85 = vrot.slane %v67, %v84
      %vm86 = vcmp.le.f32.partialorder %v69, %v85
      %vm87 = vcmp.le.f32.partialorder %v70, %v85
      %v88 = vsel %vm86, 1, 0
      %v89 = vsel %vm87, 1, 0
      %v90 = vcvt.s32.f32 %v88
      %v91 = vcvt.s32.f32 %v89
      %v92 = vpack.c.bf16 %v91, %v90
      %vm93 = vcmask 130048
      %v95 = vsel %vm93, 1065369472, 0
      %97 = vmatprep.subr.bf16.mxu0 0
      %98 = vmatpush1.bf16.msra.mxu0 %v81
      %99 = vmatprep.subr.bf16.mxu0 0
      %100 = vmatpush1.bf16.msra.mxu0 0
      %101 = vmatprep.subr.bf16.mxu0 0
      %102 = vmatpush1.bf16.msra.mxu0 0
      %103 = vmatprep.subr.bf16.mxu0 0
      %104 = vmatpush1.bf16.msra.mxu0 0
      %105 = vmatprep.subr.bf16.mxu0 0
      %106 = vmatpush1.bf16.msra.mxu0 0
      %107 = vmatprep.subr.bf16.mxu0 0
      %108 = vmatpush1.bf16.msra.mxu0 0
      %109 = vmatprep.subr.bf16.mxu0 0
      %110 = vmatpush1.bf16.msra.mxu0 0
      %111 = vmatprep.subr.bf16.mxu0 0
      %112 = vmatpush1.bf16.msra.mxu0 0
      %113 = vmatprep.subr.bf16.mxu0 0
      %114 = vmatpush1.bf16.msra.mxu0 0
      %115 = vmatprep.subr.bf16.mxu0 0
      %116 = vmatpush1.bf16.msra.mxu0 0
      %117 = vmatprep.subr.bf16.mxu0 0
      %118 = vmatpush1.bf16.msra.mxu0 0
      %119 = vmatprep.subr.bf16.mxu0 0
      %120 = vmatpush1.bf16.msra.mxu0 0
      %121 = vmatprep.subr.bf16.mxu0 0
      %122 = vmatpush1.bf16.msra.mxu0 0
      %123 = vmatprep.subr.bf16.mxu0 0
      %124 = vmatpush1.bf16.msra.mxu0 0
      %125 = vmatprep.subr.bf16.mxu0 0
      %126 = vmatpush1.bf16.msra.mxu0 0
      %127 = vmatprep.subr.bf16.mxu0 0
      %128 = vmatpush1.bf16.msra.mxu0 0
      %129 = vmatprep.mubr.bf16.mxu0 0
      %130 = vmatmul.mubr.bf16.gmra.mrb[0].mxu0 %v95
      %v131 = vpop.f32.mrb[0].mxu0
      %v132 = vadd.f32 0.0, %v131
      %v133 = vpop.f32.mrb[0].mxu0
      %v134 = vpop.f32.mrb[0].mxu0
      %v135 = vpop.f32.mrb[0].mxu0
      %136 = vdwg.mxu0
      %137 = vmatprep.subr.bf16.mxu0 0
      %138 = vmatpush1.bf16.msra.mxu0 %v92
      %139 = vmatprep.subr.bf16.mxu0 0
      %140 = vmatpush1.bf16.msra.mxu0 0
      %141 = vmatprep.subr.bf16.mxu0 0
      %142 = vmatpush1.bf16.msra.mxu0 0
      %143 = vmatprep.subr.bf16.mxu0 0
      %144 = vmatpush1.bf16.msra.mxu0 0
      %145 = vmatprep.subr.bf16.mxu0 0
      %146 = vmatpush1.bf16.msra.mxu0 0
      %147 = vmatprep.subr.bf16.mxu0 0
      %148 = vmatpush1.bf16.msra.mxu0 0
      %149 = vmatprep.subr.bf16.mxu0 0
      %150 = vmatpush1.bf16.msra.mxu0 0
      %151 = vmatprep.subr.bf16.mxu0 0
      %152 = vmatpush1.bf16.msra.mxu0 0
      %153 = vmatprep.subr.bf16.mxu0 0
      %154 = vmatpush1.bf16.msra.mxu0 0
      %155 = vmatprep.subr.bf16.mxu0 0
      %156 = vmatpush1.bf16.msra.mxu0 0
      %157 = vmatprep.subr.bf16.mxu0 0
      %158 = vmatpush1.bf16.msra.mxu0 0
      %159 = vmatprep.subr.bf16.mxu0 0
      %160 = vmatpush1.bf16.msra.mxu0 0
      %161 = vmatprep.subr.bf16.mxu0 0
      %162 = vmatpush1.bf16.msra.mxu0 0
      %163 = vmatprep.subr.bf16.mxu0 0
      %164 = vmatpush1.bf16.msra.mxu0 0
      %165 = vmatprep.subr.bf16.mxu0 0
      %166 = vmatpush1.bf16.msra.mxu0 0
      %167 = vmatprep.subr.bf16.mxu0 0
      %168 = vmatpush1.bf16.msra.mxu0 0
      %169 = vmatprep.mubr.bf16.mxu0 0
      %170 = vmatmul.mubr.bf16.gmra.mrb[0].mxu0 %v95
      %v171 = vpop.f32.mrb[0].mxu0
      %v172 = vadd.f32 0.0, %v171
      %v173 = vpop.f32.mrb[0].mxu0
      %v174 = vpop.f32.mrb[0].mxu0
      %v175 = vpop.f32.mrb[0].mxu0
      %176 = vdwg.mxu0
      %v177 = vcvt.f32.s32.to.zero.pseudo %v132
      %vm178 = vcmask 1040384
      %v179 = vsel %vm178, %v177, 0
      %v180 = vand.u32 %v179, 65535
      %v181 = vshrl.u32 %v179, 16
      %v182 = vcvt.s32.f32 %v180
      %v183 = vcvt.s32.f32 %v181
      %184 = vadd.xlane.f32.xlu0 %v182
      %v185 = vpop.xlane.xlu0 %184
      %186 = vadd.xlane.f32.xlu0 %v183
      %v187 = vpop.xlane.xlu0 %186
      %v188 = vcvt.f32.s32 %v185
      %v189 = vcvt.f32.s32 %v187
      %v190 = vshll.u32 %v189, 16
      %v191 = vadd.s32 %v190, %v188
      %v192 = vcvt.f32.s32.to.zero.pseudo %v172
      %v193 = vsel %vm178, %v192, 0
      %v194 = vand.u32 %v193, 65535
      %v195 = vshrl.u32 %v193, 16
      %v196 = vcvt.s32.f32 %v194
      %v197 = vcvt.s32.f32 %v195
      %198 = vadd.xlane.f32.xlu0 %v196
      %v199 = vpop.xlane.xlu0 %198
      %200 = vadd.xlane.f32.xlu0 %v197
      %v201 = vpop.xlane.xlu0 %200
      %v202 = vcvt.f32.s32 %v199
      %v203 = vcvt.f32.s32 %v201
      %v204 = vshll.u32 %v203, 16
      %v205 = vadd.s32 %v204, %v202
      %vm206 = vcmp.ge.s32.totalorder %v191, 103
      %vm207 = vcmp.ge.s32.totalorder %v205, 1945
      %v208 = vadd.s32 %v54, 1
      %v209 = vsel %vm206, %v45, %v208
      %v210 = vsel %vm206, %v54, %v46
      %v211 = vadd.s32 %v60, 1
      %v212 = vsel %vm207, %v47, %v211
      %v213 = vsel %vm207, %v60, %v48
    $region22: #{tpu_custom_call.1} parent=1 // loop_footer
      %s44 = sadd.s32 1, %s40
    $region23: #{tpu_custom_call.1} parent=1 // loop_footer_branch
      %39 = sbr.rel target = $region19
    $region24: #{tpu_custom_call.1} parent=1 // loop_exit
      _
    %vm214 = vcmp.ge.s32.totalorder %v45, 0
    %v215 = vxor.u32 %v45, 2147483647
    %v216 = vsel %vm214, %v45, %v215
    %vm218 = vcmp.ge.s32.totalorder %v47, 0
    %v219 = vxor.u32 %v47, 2147483647
    %v220 = vsel %vm218, %v47, %v219
    %v222 = vld [vmem:[#allocation4] sm:$0xff]
    %v223 = vld [vmem:[#allocation4 + $0x8] sm:$0xff]
    %v224 = vlaneseq
    %v225 = vshrl.u32 %v224, 7
    %v226 = vsub.s32 0, %v225
    %v227 = vrot.slane %v216, %v226
    %vm228 = vcmp.le.f32.partialorder %v222, %v227
    %vm229 = vcmp.le.f32.partialorder %v223, %v227
    %v230 = vsel %vm228, 1, 0
    %v231 = vsel %vm229, 1, 0
    %v232 = vcvt.s32.f32 %v230
    %v233 = vcvt.s32.f32 %v231
    %v234 = vpack.c.bf16 %v233, %v232
    %v235 = vlaneseq
    %v236 = vshrl.u32 %v235, 7
    %v237 = vsub.s32 0, %v236
    %v238 = vrot.slane %v220, %v237
    %vm239 = vcmp.le.f32.partialorder %v222, %v238
    %vm240 = vcmp.le.f32.partialorder %v223, %v238
    %v241 = vsel %vm239, 1, 0
    %v242 = vsel %vm240, 1, 0
    %v243 = vcvt.s32.f32 %v241
    %v244 = vcvt.s32.f32 %v242
    %v245 = vpack.c.bf16 %v244, %v243
    %vm246 = vcmask 130048
    %v248 = vsel %vm246, 1065369472, 0
    %250 = vmatprep.subr.bf16.mxu0 0
    %251 = vmatpush1.bf16.msra.mxu0 %v234
    %252 = vmatprep.subr.bf16.mxu0 0
    %253 = vmatpush1.bf16.msra.mxu0 0
    %254 = vmatprep.subr.bf16.mxu0 0
    %255 = vmatpush1.bf16.msra.mxu0 0
    %256 = vmatprep.subr.bf16.mxu0 0
    %257 = vmatpush1.bf16.msra.mxu0 0
    %258 = vmatprep.subr.bf16.mxu0 0
    %259 = vmatpush1.bf16.msra.mxu0 0
    %260 = vmatprep.subr.bf16.mxu0 0
    %261 = vmatpush1.bf16.msra.mxu0 0
    %262 = vmatprep.subr.bf16.mxu0 0
    %263 = vmatpush1.bf16.msra.mxu0 0
    %264 = vmatprep.subr.bf16.mxu0 0
    %265 = vmatpush1.bf16.msra.mxu0 0
    %266 = vmatprep.subr.bf16.mxu0 0
    %267 = vmatpush1.bf16.msra.mxu0 0
    %268 = vmatprep.subr.bf16.mxu0 0
    %269 = vmatpush1.bf16.msra.mxu0 0
    %270 = vmatprep.subr.bf16.mxu0 0
    %271 = vmatpush1.bf16.msra.mxu0 0
    %272 = vmatprep.subr.bf16.mxu0 0
    %273 = vmatpush1.bf16.msra.mxu0 0
    %274 = vmatprep.subr.bf16.mxu0 0
    %275 = vmatpush1.bf16.msra.mxu0 0
    %276 = vmatprep.subr.bf16.mxu0 0
    %277 = vmatpush1.bf16.msra.mxu0 0
    %278 = vmatprep.subr.bf16.mxu0 0
    %279 = vmatpush1.bf16.msra.mxu0 0
    %280 = vmatprep.subr.bf16.mxu0 0
    %281 = vmatpush1.bf16.msra.mxu0 0
    %282 = vmatprep.mubr.bf16.mxu0 0
    %283 = vmatmul.mubr.bf16.gmra.mrb[0].mxu0 %v248
    %v284 = vpop.f32.mrb[0].mxu0
    %v285 = vadd.f32 0.0, %v284
    %v286 = vpop.f32.mrb[0].mxu0
    %v287 = vpop.f32.mrb[0].mxu0
    %v288 = vpop.f32.mrb[0].mxu0
    %289 = vdwg.mxu0
    %290 = vmatprep.subr.bf16.mxu0 0
    %291 = vmatpush1.bf16.msra.mxu0 %v245
    %292 = vmatprep.subr.bf16.mxu0 0
    %293 = vmatpush1.bf16.msra.mxu0 0
    %294 = vmatprep.subr.bf16.mxu0 0
    %295 = vmatpush1.bf16.msra.mxu0 0
    %296 = vmatprep.subr.bf16.mxu0 0
    %297 = vmatpush1.bf16.msra.mxu0 0
    %298 = vmatprep.subr.bf16.mxu0 0
    %299 = vmatpush1.bf16.msra.mxu0 0
    %300 = vmatprep.subr.bf16.mxu0 0
    %301 = vmatpush1.bf16.msra.mxu0 0
    %302 = vmatprep.subr.bf16.mxu0 0
    %303 = vmatpush1.bf16.msra.mxu0 0
    %304 = vmatprep.subr.bf16.mxu0 0
    %305 = vmatpush1.bf16.msra.mxu0 0
    %306 = vmatprep.subr.bf16.mxu0 0
    %307 = vmatpush1.bf16.msra.mxu0 0
    %308 = vmatprep.subr.bf16.mxu0 0
    %309 = vmatpush1.bf16.msra.mxu0 0
    %310 = vmatprep.subr.bf16.mxu0 0
    %311 = vmatpush1.bf16.msra.mxu0 0
    %312 = vmatprep.subr.bf16.mxu0 0
    %313 = vmatpush1.bf16.msra.mxu0 0
    %314 = vmatprep.subr.bf16.mxu0 0
    %315 = vmatpush1.bf16.msra.mxu0 0
    %316 = vmatprep.subr.bf16.mxu0 0
    %317 = vmatpush1.bf16.msra.mxu0 0
    %318 = vmatprep.subr.bf16.mxu0 0
    %319 = vmatpush1.bf16.msra.mxu0 0
    %320 = vmatprep.subr.bf16.mxu0 0
    %321 = vmatpush1.bf16.msra.mxu0 0
    %322 = vmatprep.mubr.bf16.mxu0 0
    %323 = vmatmul.mubr.bf16.gmra.mrb[0].mxu0 %v248
    %v324 = vpop.f32.mrb[0].mxu0
    %v325 = vadd.f32 0.0, %v324
    %v326 = vpop.f32.mrb[0].mxu0
    %v327 = vpop.f32.mrb[0].mxu0
    %v328 = vpop.f32.mrb[0].mxu0
    %329 = vdwg.mxu0
    %vm330 = vcmp.gt.f32.partialorder %v222, %v227
    %vm331 = vcmp.gt.f32.partialorder %v223, %v227
    %v332 = vsel %vm330, %v222, inf
    %v333 = vsel %vm331, %v223, inf
    %v334 = vmin.f32 %v332, %v333
    %v335 = vrot.slane %v334, 4
    %v336 = vmin.f32 %v334, %v335
    %v337 = vrot.slane %v336, 2
    %v338 = vmin.f32 %v336, %v337
    %v339 = vrot.slane %v338, 1
    %v340 = vmin.f32 %v338, %v339
    %vm341 = vcmp.gt.f32.partialorder %v222, %v238
    %vm342 = vcmp.gt.f32.partialorder %v223, %v238
    %v343 = vsel %vm341, %v222, inf
    %v344 = vsel %vm342, %v223, inf
    %v345 = vmin.f32 %v343, %v344
    %v346 = vrot.slane %v345, 4
    %v347 = vmin.f32 %v345, %v346
    %v348 = vrot.slane %v347, 2
    %v349 = vmin.f32 %v347, %v348
    %v350 = vrot.slane %v349, 1
    %v351 = vmin.f32 %v349, %v350
    %v352 = vcvt.f32.s32.to.zero.pseudo %v285
    %vm353 = vcmask 1040384
    %v354 = vsel %vm353, %v352, 0
    %v355 = vand.u32 %v354, 65535
    %v356 = vshrl.u32 %v354, 16
    %v357 = vcvt.s32.f32 %v355
    %v358 = vcvt.s32.f32 %v356
    %359 = vadd.xlane.f32.xlu0 %v357
    %v360 = vpop.xlane.xlu0 %359
    %361 = vadd.xlane.f32.xlu0 %v358
    %v362 = vpop.xlane.xlu0 %361
    %v363 = vcvt.f32.s32 %v360
    %v364 = vcvt.f32.s32 %v362
    %v365 = vshll.u32 %v364, 16
    %v366 = vadd.s32 %v365, %v363
    %v367 = vcvt.f32.s32.to.zero.pseudo %v325
    %v368 = vsel %vm353, %v367, 0
    %v369 = vand.u32 %v368, 65535
    %v370 = vshrl.u32 %v368, 16
    %v371 = vcvt.s32.f32 %v369
    %v372 = vcvt.s32.f32 %v370
    %373 = vadd.xlane.f32.xlu0 %v371
    %v374 = vpop.xlane.xlu0 %373
    %375 = vadd.xlane.f32.xlu0 %v372
    %v376 = vpop.xlane.xlu0 %375
    %v377 = vcvt.f32.s32 %v374
    %v378 = vcvt.f32.s32 %v376
    %v379 = vshll.u32 %v378, 16
    %v380 = vadd.s32 %v379, %v377
    %381 = vmin.xlane.f32.xlu0 %v340
    %v382 = vpop.xlane.xlu0 %381
    %383 = vmin.xlane.f32.xlu0 %v351
    %v384 = vpop.xlane.xlu0 %383
    %vm385 = vcmp.ge.s32.totalorder %v366, 104
    %v386 = vsel %vm385, %v216, %v382
    %v387 = vsub.f32 %v386, %v216
    %v388 = vmul.f32 %v387, 0.35
    %v389 = vadd.f32 %v216, %v388
    %vm390 = vcmp.ge.s32.totalorder %v380, 1946
    %v391 = vsel %vm390, %v220, %v384
    %v392 = vsub.f32 %v391, %v220
    %v393 = vmul.f32 %v392, 0.65
    %v394 = vadd.f32 %v220, %v393
    %v395 = vld [vmem:[#allocation2] sm:$0x1]
    %v396 = vmul.f32 %v395, 0.99
    %v397 = vmul.f32 %v389, 0.01
    %v398 = vadd.f32 %v396, %v397
    %v399 = vld [vmem:[#allocation3] sm:$0x1]
    %v400 = vmul.f32 %v399, 0.99
    %v401 = vmul.f32 %v394, 0.01
    %v402 = vadd.f32 %v400, %v401
    %v403 = vsub.f32 %v402, %v398
    %v404 = vmax.f32 %v403, 1.0
    %vm405 = vcmask 0
    %406 = vst.msk [vmem:[#allocation7] sm:$0x1] %vm405, %v398
    %407 = vst.msk [vmem:[#allocation8] sm:$0x1] %vm405, %v402
    %408 = vst.msk [vmem:[#allocation10] sm:$0x1] %vm405, %v404
    // Predicated region
    $region25: #{tpu_custom_call.1} parent=1 // pred_check
      _
    $region26: #{tpu_custom_call.1} parent=1 // pred_check_branch
      %410 = sbr.rel (0) target = $region28
    $region27: #{tpu_custom_call.1} parent=1 // pred_region
      %s412 = ssub.s32 16, 16
      %413 = vsyncadd [#allocation6], %s412
      %s415 = sshll.u32 [#allocation7], 4
      %s416 = int_to_ptr.vmem [resolvable:$true] %s415
      %418 = dma.vmem_to_hbm [thread:$0]  %s416, 16, %s3, [#allocation6]
    $region28: #{tpu_custom_call.1} parent=1 // pred_fallthru
      _
    // Predicated region
    $region29: #{tpu_custom_call.1} parent=1 // pred_check
      _
    $region30: #{tpu_custom_call.1} parent=1 // pred_check_branch
      %420 = sbr.rel (0) target = $region32
    $region31: #{tpu_custom_call.1} parent=1 // pred_region
      %s422 = ssub.s32 16, 16
      %423 = vsyncadd [#allocation9], %s422
      %s425 = sshll.u32 [#allocation8], 4
      %s426 = int_to_ptr.vmem [resolvable:$true] %s425
      %428 = dma.vmem_to_hbm [thread:$0]  %s426, 16, %s4, [#allocation9]
    $region32: #{tpu_custom_call.1} parent=1 // pred_fallthru
      _
    // Predicated region
    $region33: #{tpu_custom_call.1} parent=1 // pred_check
      _
    $region34: #{tpu_custom_call.1} parent=1 // pred_check_branch
      %430 = sbr.rel (0) target = $region36
    $region35: #{tpu_custom_call.1} parent=1 // pred_region
      %s432 = ssub.s32 16, 16
      %433 = vsyncadd [#allocation9], %s432
      %s435 = sshll.u32 [#allocation10], 4
      %s436 = int_to_ptr.vmem [resolvable:$true] %s435
      %438 = dma.vmem_to_hbm [thread:$0]  %s436, 16, %s5, [#allocation9]
    $region36: #{tpu_custom_call.1} parent=1 // pred_fallthru
      _
    // Predicated region
    $region37: #{tpu_custom_call.1} parent=1 // pred_check
      _
    $region38: #{tpu_custom_call.1} parent=1 // pred_check_branch
      %440 = sbr.rel (0) target = $region40
    $region39: #{tpu_custom_call.1} parent=1 // pred_region
      %441 = dma.done [#allocation6], 16
    $region40: #{tpu_custom_call.1} parent=1 // pred_fallthru
      _
    // Predicated region
    $region41: #{tpu_custom_call.1} parent=1 // pred_check
      _
    $region42: #{tpu_custom_call.1} parent=1 // pred_check_branch
      %443 = sbr.rel (0) target = $region44
    $region43: #{tpu_custom_call.1} parent=1 // pred_region
      %444 = dma.done [#allocation9], 16
    $region44: #{tpu_custom_call.1} parent=1 // pred_fallthru
      _
    // Predicated region
    $region45: #{tpu_custom_call.1} parent=1 // pred_check
      _
    $region46: #{tpu_custom_call.1} parent=1 // pred_check_branch
      %446 = sbr.rel (0) target = $region48
    $region47: #{tpu_custom_call.1} parent=1 // pred_region
      %447 = dma.done [#allocation9], 16
    $region48: #{tpu_custom_call.1} parent=1 // pred_fallthru
      _
    %448 = vsyncpa [#allocation5], 1
    %449 = vsyncpa [#allocation6], 1
    %450 = vsyncpa [#allocation9], 1

</llo_original>
